<compile_context>
chip_gen: v6e
topology: v6e:2x2x1
jax: 0.10.0
libtpu: 0.0.40
codegen_flags: <defaults>
</compile_context>

<pallas_src>
from functools import partial

import jax
import jax.numpy as jnp
from jax.experimental import pallas as pl
from jax.experimental.pallas import tpu as pltpu


# ----------------------------------------------------------------------------
# helpers
# ----------------------------------------------------------------------------
def _round_up(x, m):
    return ((x + m - 1) // m) * m


def _vmem_limit_bytes():
    """Generation-aware VMEM request: headroom on v7x, more room on v5e/v6e."""
    cap = None
    try:
        info = pltpu.get_tpu_info()
        cap = int(getattr(info, "vmem_capacity_bytes", 0)) or None
    except Exception:
        cap = None
    if cap is None:
        return 48 * 1024 * 1024                      # safe on every generation
    return int(min(max(cap - 16 * 1024 * 1024, 32 * 1024 * 1024),
                   112 * 1024 * 1024))


VMEM_LIMIT = _vmem_limit_bytes()

_N_TILE_CANDS = (1024, 768, 512, 384, 256, 128)      # lane tiles: 128-multiples
_K_TILE_CANDS = (2048, 1280, 1024, 640, 512, 256, 128)


def _pick_tile(n, max_tile, cands):
    if n <= max_tile:
        return n
    for c in cands:
        if c <= max_tile and n % c == 0:
            return c
    return n


# ----------------------------------------------------------------------------
# Fused LayerNorm + matmul (+ bias, optional QuickGELU)
# ----------------------------------------------------------------------------
def _ln_matmul_kernel(x_ref, w_ref, b_ref, g_ref, beta_ref, o_ref, xn_ref,
                      *, eps, act):
    # LN prologue: computed once per row tile (j == 0) and cached in VMEM.
    @pl.when(pl.program_id(1) == 0)
    def _():
        x = x_ref[...].astype(jnp.float32)
        mu = jnp.mean(x, axis=-1, keepdims=True)
        xc = x - mu
        var = jnp.mean(xc * xc, axis=-1, keepdims=True)
        y = xc * jax.lax.rsqrt(var + eps)
        y = y * g_ref[...] + beta_ref[...]
        xn_ref[...] = y.astype(xn_ref.dtype)

    r = jnp.dot(xn_ref[...], w_ref[...], preferred_element_type=jnp.float32)
    r = r + b_ref[...]
    if act == "quickgelu":
        r = r * jax.nn.sigmoid(1.702 * r)
    o_ref[...] = r.astype(o_ref.dtype)


def ln_matmul(x, w, bias, gamma, beta, *, tm, act="none", eps=1e-6,
              out_dtype=jnp.bfloat16):
    M, K = x.shape
    K2, N = w.shape
    assert K == K2 and M % tm == 0
    tn = _pick_tile(N, 1024, _N_TILE_CANDS)
    return pl.pallas_call(
        partial(_ln_matmul_kernel, eps=eps, act=act),
        out_shape=jax.ShapeDtypeStruct((M, N), out_dtype),
        grid=(M // tm, N // tn),
        in_specs=[
            pl.BlockSpec((tm, K), lambda i, j: (i, 0)),
            pl.BlockSpec((K, tn), lambda i, j: (0, j)),
            pl.BlockSpec((1, tn), lambda i, j: (0, j)),
            pl.BlockSpec((1, K), lambda i, j: (0, 0)),
            pl.BlockSpec((1, K), lambda i, j: (0, 0)),
        ],
        out_specs=pl.BlockSpec((tm, tn), lambda i, j: (i, j)),
        scratch_shapes=[pltpu.VMEM((tm, K), jnp.bfloat16)],
        compiler_params=pltpu.CompilerParams(
            dimension_semantics=("parallel", "arbitrary"),
            vmem_limit_bytes=VMEM_LIMIT,
        ),
    )(x, w, bias.reshape(1, N).astype(jnp.float32),
      gamma.reshape(1, K).astype(jnp.float32),
      beta.reshape(1, K).astype(jnp.float32))


# ----------------------------------------------------------------------------
# Tiled matmul + bias + fused residual add
# ----------------------------------------------------------------------------
def _matmul_res_kernel(a_ref, w_ref, b_ref, res_ref, o_ref, acc_ref):
    @pl.when(pl.program_id(2) == 0)
    def _():
        acc_ref[...] = jnp.zeros_like(acc_ref)

    acc_ref[...] += jnp.dot(a_ref[...], w_ref[...],
                            preferred_element_type=jnp.float32)

    @pl.when(pl.program_id(2) == pl.num_programs(2) - 1)
    def _():
        r = acc_ref[...] + b_ref[...] + res_ref[...].astype(jnp.float32)
        o_ref[...] = r.astype(o_ref.dtype)


def matmul_bias_residual(a, w, bias, residual, *, tm, out_dtype=jnp.float32):
    M, K = a.shape
    K2, N = w.shape
    assert K == K2 and M % tm == 0
    tn = _pick_tile(N, 1024, _N_TILE_CANDS)
    tk = _pick_tile(K, 2048, _K_TILE_CANDS)
    return pl.pallas_call(
        _matmul_res_kernel,
        out_shape=jax.ShapeDtypeStruct((M, N), out_dtype),
        grid=(M // tm, N // tn, K // tk),
        in_specs=[
            pl.BlockSpec((tm, tk), lambda i, j, k: (i, k)),
            pl.BlockSpec((tk, tn), lambda i, j, k: (k, j)),
            pl.BlockSpec((1, tn), lambda i, j, k: (0, j)),
            pl.BlockSpec((tm, tn), lambda i, j, k: (i, j)),
        ],
        out_specs=pl.BlockSpec((tm, tn), lambda i, j, k: (i, j)),
        scratch_shapes=[pltpu.VMEM((tm, tn), jnp.float32)],
        compiler_params=pltpu.CompilerParams(
            dimension_semantics=("parallel", "parallel", "arbitrary"),
            vmem_limit_bytes=VMEM_LIMIT,
        ),
    )(a, w, bias.reshape(1, N).astype(jnp.float32), residual)


# ----------------------------------------------------------------------------
# Rotary embedding + head split.  Reads the (M, 3H, Dh) view of the qkv
# projection and writes q/k/v head-major (H, M, Dh) -- the "transpose" is done
# by the output DMA, not by XLA.  The 1/sqrt(Dh) scale is folded into q here.
# ----------------------------------------------------------------------------
def _rope_split_kernel(qkv_ref, cos_ref, sin_ref, q_ref, k_ref, v_ref,
                       *, num_heads, scale):
    cos = cos_ref[...]                       # (tr, Dh/2) f32
    sin = sin_ref[...]
    H = num_heads

    def rope(x):                             # x: (tr, Dh) f32
        half = x.shape[-1] // 2
        x1 = x[:, :half]
        x2 = x[:, half:]
        return jnp.concatenate([x1 * cos - x2 * sin,
                                x2 * cos + x1 * sin], axis=-1)

    for h in range(H):                       # static unrolled head loop
        q = qkv_ref[:, h, :].astype(jnp.float32) * scale
        k = qkv_ref[:, H + h, :].astype(jnp.float32)
        q_ref[h] = rope(q).astype(q_ref.dtype)
        k_ref[h] = rope(k).astype(k_ref.dtype)
        v_ref[h] = qkv_ref[:, 2 * H + h, :].astype(v_ref.dtype)


def rope_split_heads(qkv3, cos_tok, sin_tok, *, num_heads, tr, scale):
    Mp, threeH, Dh = qkv3.shape
    H = num_heads
    assert threeH == 3 * H and Mp % tr == 0
    out = jax.ShapeDtypeStruct((H, Mp, Dh), jnp.bfloat16)
    spec_out = pl.BlockSpec((H, tr, Dh), lambda i: (0, i, 0))
    return pl.pallas_call(
        partial(_rope_split_kernel, num_heads=H, scale=scale),
        out_shape=(out, out, out),
        grid=(Mp // tr,),
        in_specs=[
            pl.BlockSpec((tr, 3 * H, Dh), lambda i: (i, 0, 0)),
            pl.BlockSpec((tr, Dh // 2), lambda i: (i, 0)),
            pl.BlockSpec((tr, Dh // 2), lambda i: (i, 0)),
        ],
        out_specs=[spec_out, spec_out, spec_out],
        compiler_params=pltpu.CompilerParams(
            dimension_semantics=("parallel",),
            vmem_limit_bytes=VMEM_LIMIT,
        ),
    )(qkv3, cos_tok, sin_tok)


# ----------------------------------------------------------------------------
# Flash attention, segment masked (varlen, non-causal), all heads per step.
# Scalar-prefetched per-block segment ranges skip fully-masked (qi, kvi) tiles
# (block-diagonal mask in b-major token order).
# ----------------------------------------------------------------------------
def _flash_attn_kernel(qmin_ref, qmax_ref, kmin_ref, kmax_ref,
                       segq_ref, segk_ref, q_ref, k_ref, v_ref, o_ref,
                       m_scr, l_scr, acc_scr, *, num_heads):
    qi = pl.program_id(0)
    kvi = pl.program_id(1)
    H = num_heads

    @pl.when(kvi == 0)
    def _():
        m_scr[...] = jnp.full_like(m_scr, -jnp.inf)
        l_scr[...] = jnp.zeros_like(l_scr)
        acc_scr[...] = jnp.zeros_like(acc_scr)

    overlap = jnp.logical_and(qmin_ref[qi] <= kmax_ref[kvi],
                              kmin_ref[kvi] <= qmax_ref[qi])

    @pl.when(overlap)
    def _():
        same = segq_ref[...] == segk_ref[...]            # (tq,1)==(1,tk)->(tq,tk)
        for h in range(H):                               # static unrolled heads
            s = jax.lax.dot_general(q_ref[h], k_ref[h],
                                    (((1,), (1,)), ((), ())),
                                    preferred_element_type=jnp.float32)
            s = jnp.where(same, s, -1e30)                # finite mask
            m_prev = m_scr[:, h:h + 1]
            m_new = jnp.maximum(m_prev, jnp.max(s, axis=-1, keepdims=True))
            alpha = jnp.exp(m_prev - m_new)
            p = jnp.exp(s - m_new)
            l_scr[:, h:h + 1] = alpha * l_scr[:, h:h + 1] + jnp.sum(
                p, axis=-1, keepdims=True)
            acc_scr[h] = alpha * acc_scr[h] + jnp.dot(
                p.astype(v_ref.dtype), v_ref[h],
                preferred_element_type=jnp.float32)
            m_scr[:, h:h + 1] = m_new

    @pl.when(kvi == pl.num_programs(1) - 1)
    def _():
        inv = pl.reciprocal(l_scr[...], approx=False)    # (tq, H)
        parts = [(acc_scr[h] * inv[:, h:h + 1]).astype(o_ref.dtype)
                 for h in range(H)]
        o_ref[...] = jnp.concatenate(parts, axis=-1)     # lane-dense (tq, dim)


def flash_attention(q, k, v, segq, segk, qmin, qmax, kmin, kmax, *, tq, tkv):
    H, Mp, Dh = q.shape
    nqb, nkb = Mp // tq, Mp // tkv
    # TODO(synk): also use the prefetched segment offsets in a data-dependent
    # kv index_map so K/V DMAs for fully-masked tiles are skipped as well.
    return pl.pallas_call(
        partial(_flash_attn_kernel, num_heads=H),
        out_shape=jax.ShapeDtypeStruct((Mp, H * Dh), jnp.bfloat16),
        grid_spec=pltpu.PrefetchScalarGridSpec(
            num_scalar_prefetch=4,
            grid=(nqb, nkb),
            in_specs=[
                pl.BlockSpec((tq, 1), lambda qi, kvi, *_: (qi, 0)),
                pl.BlockSpec((1, tkv), lambda qi, kvi, *_: (0, kvi)),
                pl.BlockSpec((H, tq, Dh), lambda qi, kvi, *_: (0, qi, 0)),
                pl.BlockSpec((H, tkv, Dh), lambda qi, kvi, *_: (0, kvi, 0)),
                pl.BlockSpec((H, tkv, Dh), lambda qi, kvi, *_: (0, kvi, 0)),
            ],
            out_specs=pl.BlockSpec((tq, H * Dh), lambda qi, kvi, *_: (qi, 0)),
            scratch_shapes=[
                pltpu.VMEM((tq, H), jnp.float32),       # m
                pltpu.VMEM((tq, H), jnp.float32),       # l
                pltpu.VMEM((H, tq, Dh), jnp.float32),   # acc
            ],
        ),
        compiler_params=pltpu.CompilerParams(
            dimension_semantics=("parallel", "arbitrary"),
            vmem_limit_bytes=VMEM_LIMIT,
        ),
    )(qmin, qmax, kmin, kmax, segq, segk, q, k, v)


# ----------------------------------------------------------------------------
# Parameter preparation (done once, outside the per-call path):
#   * cast weights to bf16,
#   * regroup the qkv output columns [h0:(q k v), h1:(q k v), ...] into
#     [Q(all heads) | K(all heads) | V(all heads)] so the projection output is
#     a free view of (M, 3H, Dh).
# ----------------------------------------------------------------------------
def prepare_params(p, num_heads):
    H = num_heads
    dim = p["Wqkv"].shape[0]
    Dh = dim // H
    Wqkv = p["Wqkv"].reshape(dim, H, 3, Dh).transpose(0, 2, 1, 3)
    Wqkv = Wqkv.reshape(dim, 3 * dim)
    bqkv = p["bqkv"].reshape(H, 3, Dh).transpose(1, 0, 2).reshape(3 * dim)
    bf16 = jnp.bfloat16
    return {
        "ln1_w": p["ln1_w"].astype(jnp.float32),
        "ln1_b": p["ln1_b"].astype(jnp.float32),
        "ln2_w": p["ln2_w"].astype(jnp.float32),
        "ln2_b": p["ln2_b"].astype(jnp.float32),
        "Wqkv": Wqkv.astype(bf16), "bqkv": bqkv.astype(jnp.float32),
        "Wproj": p["Wproj"].astype(bf16), "bproj": p["bproj"].astype(jnp.float32),
        "Wfc1": p["Wfc1"].astype(bf16), "bfc1": p["bfc1"].astype(jnp.float32),
        "Wfc2": p["Wfc2"].astype(bf16), "bfc2": p["bfc2"].astype(jnp.float32),
    }


# ----------------------------------------------------------------------------
# Qwen2VisionBlock forward
# ----------------------------------------------------------------------------
def qwen2_vision_block(x, cu_seqlens, rotary_pos_emb, prep, num_heads):
    s, b, dim = x.shape
    H = num_heads
    assert dim % H == 0
    Dh = dim // H
    assert rotary_pos_emb.shape[-1] * 2 == Dh
    T = s * b
    n_seg = int(cu_seqlens.shape[0]) - 1

    # token tiles (attention q/kv tiles kept large; pads are sliced off at end)
    if T >= 3 * 512:
        TOK = 512
    elif T >= 3 * 256:
        TOK = 256
    else:
        TOK = 128
    Mp = _round_up(T, TOK)
    tm = tq = tkv = TOK
    tr = min(TOK, 256)

    # b-major token order -> block-diagonal segment mask
    xb = jnp.transpose(x, (1, 0, 2)).reshape(T, dim).astype(jnp.float32)
    if Mp != T:
        xb = jnp.pad(xb, ((0, Mp - T), (0, 0)))

    # ---- attention branch ----
    qkv = ln_matmul(xb, prep["Wqkv"], prep["bqkv"], prep["ln1_w"],
                    prep["ln1_b"], tm=tm, out_dtype=jnp.bfloat16)
    qkv3 = qkv.reshape(Mp, 3 * H, Dh)                    # free view

    cos_s = jnp.cos(rotary_pos_emb).astype(jnp.float32)  # (s, Dh/2)
    sin_s = jnp.sin(rotary_pos_emb).astype(jnp.float32)
    cos_tok = jnp.tile(cos_s, (b, 1))                    # b-major: t = b*s + s
    sin_tok = jnp.tile(sin_s, (b, 1))
    if Mp != T:
        cos_tok = jnp.pad(cos_tok, ((0, Mp - T), (0, 0)))
        sin_tok = jnp.pad(sin_tok, ((0, Mp - T), (0, 0)))

    scale = float(Dh) ** -0.5
    qh, kh, vh = rope_split_heads(qkv3, cos_tok, sin_tok, num_heads=H, tr=tr,
                                  scale=scale)           # (H, Mp, Dh) each

    # segment ids: cu_seqlens indexes the b-major flattened token axis
    seg = jnp.searchsorted(cu_seqlens[1:].astype(jnp.int32),
                           jnp.arange(T, dtype=jnp.int32),
                           side="right").astype(jnp.int32)
    if Mp != T:
        seg = jnp.pad(seg, (0, Mp - T), constant_values=n_seg)  # pads: own seg
    segq = seg.reshape(Mp, 1)
    segk = seg.reshape(1, Mp)
    qmin = seg.reshape(Mp // tq, tq).min(axis=1)
    qmax = seg.reshape(Mp // tq, tq).max(axis=1)
    kmin = seg.reshape(Mp // tkv, tkv).min(axis=1)
    kmax = seg.reshape(Mp // tkv, tkv).max(axis=1)

    ctx = flash_attention(qh, kh, vh, segq, segk, qmin, qmax, kmin, kmax,
                          tq=tq, tkv=tkv)                # (Mp, dim) bf16

    x1 = matmul_bias_residual(ctx, prep["Wproj"], prep["bproj"], xb, tm=tm,
                              out_dtype=jnp.float32)     # x + attn

    # ---- MLP branch ----
    h1 = ln_matmul(x1, prep["Wfc1"], prep["bfc1"], prep["ln2_w"],
                   prep["ln2_b"], tm=tm, act="quickgelu",
                   out_dtype=jnp.bfloat16)
    out = matmul_bias_residual(h1, prep["Wfc2"], prep["bfc2"], x1, tm=tm,
                               out_dtype=jnp.float32)    # x + mlp

    out = out[:T].reshape(b, s, dim)
    return jnp.transpose(out, (1, 0, 2))                 # back to (s, b, dim)


# ----------------------------------------------------------------------------
# Pure-JAX reference (mirrors the module semantics with bf16 MXU operands)
# ----------------------------------------------------------------------------
def reference_block(x, cu_seqlens, rotary, params, num_heads):
    f32, bf16 = jnp.float32, jnp.bfloat16
    s, b_, dim = x.shape
    H = num_heads
    Dh = dim // H
    T = b_ * s

    def ln(t, w, bias):
        mu = t.mean(-1, keepdims=True)
        var = ((t - mu) ** 2).mean(-1, keepdims=True)
        return ((t - mu) * jax.lax.rsqrt(var + 1e-6) * w + bias).astype(bf16)

    def mm(a, w, bias):
        return jnp.dot(a.astype(bf16), w.astype(bf16),
                       preferred_element_type=f32) + bias

    x = x.astype(f32)
    h = ln(x, params["ln1_w"], params["ln1_b"])
    qkv = mm(h, params["Wqkv"], params["bqkv"]).astype(bf16)
    qkv = qkv.reshape(s, b_, H, 3 * Dh)
    q, k, v = jnp.split(qkv, 3, axis=-1)
    q = jnp.transpose(q, (1, 0, 2, 3))     # b s h d
    k = jnp.transpose(k, (1, 0, 2, 3))
    v = jnp.transpose(v, (1, 0, 2, 3))

    cos = jnp.cos(rotary)
    sin = jnp.sin(rotary)
    cosf = jnp.concatenate([cos, cos], -1)[None, :, None, :]
    sinf = jnp.concatenate([sin, sin], -1)[None, :, None, :]

    def rot_half(t):
        d = t.shape[-1] // 2
        return jnp.concatenate([-t[..., d:], t[..., :d]], -1)

    q = (q.astype(f32) * cosf + rot_half(q.astype(f32)) * sinf).astype(bf16)
    k = (k.astype(f32) * cosf + rot_half(k.astype(f32)) * sinf).astype(bf16)

    qf = q.reshape(T, H, Dh)
    kf = k.reshape(T, H, Dh)
    vf = v.reshape(T, H, Dh)
    seg = jnp.searchsorted(cu_seqlens[1:], jnp.arange(T), side="right")
    mask = seg[:, None] == seg[None, :]
    scores = jnp.einsum("thd,uhd->htu", qf, kf,
                        preferred_element_type=f32) * (float(Dh) ** -0.5)
    scores = jnp.where(mask[None], scores, -1e30)
    p = jax.nn.softmax(scores, axis=-1)
    ctx = jnp.einsum("htu,uhd->thd", p.astype(bf16), vf,
                     preferred_element_type=f32).astype(bf16)
    ctx = ctx.reshape(b_, s, dim)
    ctx = jnp.transpose(ctx, (1, 0, 2))    # s b (h d)
    x = x + mm(ctx, params["Wproj"], params["bproj"])

    h = ln(x, params["ln2_w"], params["ln2_b"])
    h1 = mm(h, params["Wfc1"], params["bfc1"])
    h1 = (h1 * jax.nn.sigmoid(1.702 * h1)).astype(bf16)
    x = x + mm(h1, params["Wfc2"], params["bfc2"])
    return x


# ----------------------------------------------------------------------------
# Main
# ----------------------------------------------------------------------------
if __name__ == "__main__":
    dim = 64
    num_heads = 2
    head_dim = dim // num_heads
    mlp_ratio = 4.0
    mlp_hidden = int(dim * mlp_ratio)
    s, b = 8, 2

    key = jax.random.PRNGKey(0)
    ks = jax.random.split(key, 16)

    params = {
        "ln1_w": 1.0 + 0.02 * jax.random.normal(ks[0], (dim,), jnp.float32),
        "ln1_b": 0.02 * jax.random.normal(ks[1], (dim,), jnp.float32),
        "ln2_w": 1.0 + 0.02 * jax.random.normal(ks[2], (dim,), jnp.float32),
        "ln2_b": 0.02 * jax.random.normal(ks[3], (dim,), jnp.float32),
        "Wqkv": jax.random.normal(ks[4], (dim, 3 * dim), jnp.float32) / jnp.sqrt(dim),
        "bqkv": 0.02 * jax.random.normal(ks[5], (3 * dim,), jnp.float32),
        "Wproj": jax.random.normal(ks[6], (dim, dim), jnp.float32) / jnp.sqrt(dim),
        "bproj": 0.02 * jax.random.normal(ks[7], (dim,), jnp.float32),
        "Wfc1": jax.random.normal(ks[8], (dim, mlp_hidden), jnp.float32) / jnp.sqrt(dim),
        "bfc1": 0.02 * jax.random.normal(ks[9], (mlp_hidden,), jnp.float32),
        "Wfc2": jax.random.normal(ks[10], (mlp_hidden, dim), jnp.float32) / jnp.sqrt(mlp_hidden),
        "bfc2": 0.02 * jax.random.normal(ks[11], (dim,), jnp.float32),
    }

    x = jax.random.normal(ks[12], (s, b, dim), jnp.float32)
    rotary_pos_emb = jax.random.normal(ks[13], (s, head_dim // 2), jnp.float32)
    cu_seqlens = jnp.array([0, s, 2 * s], jnp.int32)   # one segment per image

    prep = prepare_params(params, num_heads)
    out = qwen2_vision_block(x, cu_seqlens, rotary_pos_emb, prep, num_heads)
    out = jax.block_until_ready(out)

    ref = reference_block(x, cu_seqlens, rotary_pos_emb, params, num_heads)
    max_diff = float(jnp.max(jnp.abs(out - ref)))
    assert out.shape == (s, b, dim)
    assert max_diff < 5e-2, f"mismatch vs reference: {max_diff}"

    print("KERNEL_OK")
</pallas_src>

<mosaic_0001>
module attributes {stable_mosaic.version = 11 : i64} {
  func.func @_ln_matmul_kernel(%arg0: i32, %arg1: i32, %arg2: memref<128x64xf32, #tpu.memory_space<vmem>>, %arg3: memref<64x192xbf16, #tpu.memory_space<vmem>>, %arg4: memref<1x192xf32, #tpu.memory_space<vmem>>, %arg5: memref<1x64xf32, #tpu.memory_space<vmem>>, %arg6: memref<1x64xf32, #tpu.memory_space<vmem>>, %arg7: memref<128x192xbf16, #tpu.memory_space<vmem>>, %arg8: memref<128x64xbf16, #tpu.memory_space<vmem>>) attributes {dimension_semantics = [#tpu.dimension_semantics<parallel>, #tpu.dimension_semantics<arbitrary>], iteration_bounds = array<i64: 1, 1>, scalar_prefetch = 0 : i64, scratch_operands = 1 : i64, tpu.core_type = #tpu.core_type<tc>, window_params = [{transform_indices = @transform_0, window_bounds = array<i64: 128, 64>}, {transform_indices = @transform_1, window_bounds = array<i64: 64, 192>}, {transform_indices = @transform_2, window_bounds = array<i64: 1, 192>}, {pipeline_mode = #tpu.pipeline_mode<synchronous>, transform_indices = @transform_3, window_bounds = array<i64: 1, 64>}, {pipeline_mode = #tpu.pipeline_mode<synchronous>, transform_indices = @transform_4, window_bounds = array<i64: 1, 64>}, {transform_indices = @transform_5, window_bounds = array<i64: 128, 192>}]} {
    %c0_i32 = arith.constant 0 : i32
    %0 = arith.cmpi eq, %arg1, %c0_i32 : i32
    %1 = arith.extui %0 : i1 to i32
    %c0_i32_0 = arith.constant 0 : i32
    %2 = arith.cmpi ne, %1, %c0_i32_0 : i32
    scf.if %2 {
      %c0_8 = arith.constant 0 : index
      %c0_9 = arith.constant 0 : index
      %11 = vector.load %arg2[%c0_8, %c0_9] : memref<128x64xf32, #tpu.memory_space<vmem>>, vector<128x64xf32>
      %cst_10 = arith.constant dense<0.000000e+00> : vector<128xf32>
      %12 = vector.multi_reduction <add>, %11, %cst_10 [1] : vector<128x64xf32> to vector<128xf32>
      %13 = vector.shape_cast %12 : vector<128xf32> to vector<128x1xf32>
      %cst_11 = arith.constant 6.400000e+01 : f32
      %14 = vector.broadcast %cst_11 : f32 to vector<128x1xf32>
      %15 = arith.divf %13, %14 : vector<128x1xf32>
      %16 = vector.broadcast %15 : vector<128x1xf32> to vector<128x64xf32>
      %17 = arith.subf %11, %16 : vector<128x64xf32>
      %18 = arith.mulf %17, %17 : vector<128x64xf32>
      %cst_12 = arith.constant dense<0.000000e+00> : vector<128xf32>
      %19 = vector.multi_reduction <add>, %18, %cst_12 [1] : vector<128x64xf32> to vector<128xf32>
      %20 = vector.shape_cast %19 : vector<128xf32> to vector<128x1xf32>
      %cst_13 = arith.constant 6.400000e+01 : f32
      %21 = vector.broadcast %cst_13 : f32 to vector<128x1xf32>
      %22 = arith.divf %20, %21 : vector<128x1xf32>
      %cst_14 = arith.constant 9.99999997E-7 : f32
      %23 = vector.broadcast %cst_14 : f32 to vector<128x1xf32>
      %24 = arith.addf %22, %23 : vector<128x1xf32>
      %25 = math.rsqrt %24 : vector<128x1xf32>
      %26 = vector.broadcast %25 : vector<128x1xf32> to vector<128x64xf32>
      %27 = arith.mulf %17, %26 : vector<128x64xf32>
      %c0_15 = arith.constant 0 : index
      %c0_16 = arith.constant 0 : index
      %28 = vector.load %arg5[%c0_15, %c0_16] : memref<1x64xf32, #tpu.memory_space<vmem>>, vector<1x64xf32>
      %29 = vector.broadcast %28 : vector<1x64xf32> to vector<128x64xf32>
      %30 = arith.mulf %27, %29 : vector<128x64xf32>
      %c0_17 = arith.constant 0 : index
      %c0_18 = arith.constant 0 : index
      %31 = vector.load %arg6[%c0_17, %c0_18] : memref<1x64xf32, #tpu.memory_space<vmem>>, vector<1x64xf32>
      %32 = vector.broadcast %31 : vector<1x64xf32> to vector<128x64xf32>
      %33 = arith.addf %30, %32 : vector<128x64xf32>
      %34 = arith.truncf %33 : vector<128x64xf32> to vector<128x64xbf16>
      %c0_19 = arith.constant 0 : index
      %c0_20 = arith.constant 0 : index
      %35 = vector.load %arg8[%c0_19, %c0_20] : memref<128x64xbf16, #tpu.memory_space<vmem>>, vector<128x64xbf16>
      tpu.vector_store %arg8[%c0_19, %c0_20], %34 {strides = array<i32>} : memref<128x64xbf16, #tpu.memory_space<vmem>>, vector<128x64xbf16>,
    } else {
    }
    %c0 = arith.constant 0 : index
    %c0_1 = arith.constant 0 : index
    %3 = vector.load %arg8[%c0, %c0_1] : memref<128x64xbf16, #tpu.memory_space<vmem>>, vector<128x64xbf16>
    %c0_2 = arith.constant 0 : index
    %c0_3 = arith.constant 0 : index
    %4 = vector.load %arg3[%c0_2, %c0_3] : memref<64x192xbf16, #tpu.memory_space<vmem>>, vector<64x192xbf16>
    %cst = arith.constant dense<0.000000e+00> : vector<128x192xf32>
    %5 = tpu.matmul %3, %4, %cst {dimension_numbers = #tpu.dot_dimension_numbers<[1], [0], [0], [1], [0, 0, 1, 1], [], []>} : vector<128x64xbf16>, vector<64x192xbf16>, vector<128x192xf32> -> vector<128x192xf32>
    %c0_4 = arith.constant 0 : index
    %c0_5 = arith.constant 0 : index
    %6 = vector.load %arg4[%c0_4, %c0_5] : memref<1x192xf32, #tpu.memory_space<vmem>>, vector<1x192xf32>
    %7 = vector.broadcast %6 : vector<1x192xf32> to vector<128x192xf32>
    %8 = arith.addf %5, %7 : vector<128x192xf32>
    %9 = arith.truncf %8 : vector<128x192xf32> to vector<128x192xbf16>
    %c0_6 = arith.constant 0 : index
    %c0_7 = arith.constant 0 : index
    %10 = vector.load %arg7[%c0_6, %c0_7] : memref<128x192xbf16, #tpu.memory_space<vmem>>, vector<128x192xbf16>
    tpu.vector_store %arg7[%c0_6, %c0_7], %9 {strides = array<i32>} : memref<128x192xbf16, #tpu.memory_space<vmem>>, vector<128x192xbf16>,
    return
  }
  func.func @transform_0(%arg0: i32, %arg1: i32) -> (i32, i32) {
    %c0_i32 = arith.constant 0 : i32
    %c0_i32_0 = arith.constant 0 : i32
    return %arg0, %c0_i32 : i32, i32
  }
  func.func @transform_1(%arg0: i32, %arg1: i32) -> (i32, i32) {
    %c0_i32 = arith.constant 0 : i32
    %c0_i32_0 = arith.constant 0 : i32
    return %c0_i32, %arg1 : i32, i32
  }
  func.func @transform_2(%arg0: i32, %arg1: i32) -> (i32, i32) {
    %c0_i32 = arith.constant 0 : i32
    %c0_i32_0 = arith.constant 0 : i32
    return %c0_i32, %arg1 : i32, i32
  }
  func.func @transform_3(%arg0: i32, %arg1: i32) -> (i32, i32) {
    %c0_i32 = arith.constant 0 : i32
    %c0_i32_0 = arith.constant 0 : i32
    %c0_i32_1 = arith.constant 0 : i32
    return %c0_i32, %c0_i32_0 : i32, i32
  }
  func.func @transform_4(%arg0: i32, %arg1: i32) -> (i32, i32) {
    %c0_i32 = arith.constant 0 : i32
    %c0_i32_0 = arith.constant 0 : i32
    %c0_i32_1 = arith.constant 0 : i32
    return %c0_i32, %c0_i32_0 : i32, i32
  }
  func.func @transform_5(%arg0: i32, %arg1: i32) -> (i32, i32) {
    %c0_i32 = arith.constant 0 : i32
    return %arg0, %arg1 : i32, i32
  }
}

</mosaic_0001>

<llo_original>
// kernel: tpu_custom_call.1
$region0: #{tpu_custom_call.1}
  #allocation0 [shape = 'u32[]', space=smem, size = 0x4, offset = 0x4, fixed_abs, tag = 'smem constant byte address 0x4 - core index']
  #allocation1 [shape = 'u32[144,128]{1,0:T(1,128)}', space=vmem, size = 0x12000, scoped, tag = 'internal scratch']
  #allocation2 [shape = 'bf16[128,64]{1,0:T(8,128)(2,1)}', space=vmem, size = 0x8000, scoped, tag = 'scratch operand']
  %s0 = inlined_call_operand.vmem [shape: f32[128,64], index: 0, kind: input, shape index: {}]
  %s1 = inlined_call_operand.vmem [shape: bf16[64,192], index: 1, kind: input, shape index: {}]
  %s2 = inlined_call_operand.vmem [shape: f32[1,192], index: 2, kind: input, shape index: {}]
  %s3 = inlined_call_operand.vmem [shape: f32[1,64], index: 3, kind: input, shape index: {}]
  %s4 = inlined_call_operand.vmem [shape: f32[1,64], index: 4, kind: input, shape index: {}]
  %s5 = inlined_call_operand.vmem [shape: bf16[128,192], index: 5, kind: output, shape index: {}]
  %s6 = sld [smem:[#allocation0]]
  $region34: #{tpu_custom_call.1} parent=0
    _
  %s8 = ssub.s32 1, %s6
  %s9 = scalar_select 0, %s8, %s6
  // Predicated region
  $region2: #{tpu_custom_call.1} parent=0 // pred_check
    _
  $region3: #{tpu_custom_call.1} parent=0 // pred_check_branch
    %11 = sbr.rel (0) target = $region5
  $region4: #{tpu_custom_call.1} parent=0 // pred_region
    _
  $region5: #{tpu_custom_call.1} parent=0 // pred_fallthru
    _
  // Predicated region
  $region6: #{tpu_custom_call.1} parent=0 // pred_check
    _
  $region7: #{tpu_custom_call.1} parent=0 // pred_check_branch
    %13 = sbr.rel (0) target = $region9
  $region8: #{tpu_custom_call.1} parent=0 // pred_region
    _
  $region9: #{tpu_custom_call.1} parent=0 // pred_fallthru
    _
  // Predicated region
  $region10: #{tpu_custom_call.1} parent=0 // pred_check
    _
  $region11: #{tpu_custom_call.1} parent=0 // pred_check_branch
    %15 = sbr.rel (0) target = $region13
  $region12: #{tpu_custom_call.1} parent=0 // pred_region
    _
  $region13: #{tpu_custom_call.1} parent=0 // pred_fallthru
    _
  // Predicated region
  $region14: #{tpu_custom_call.1} parent=0 // pred_check
    _
  $region15: #{tpu_custom_call.1} parent=0 // pred_check_branch
    %17 = sbr.rel (0) target = $region17
  $region16: #{tpu_custom_call.1} parent=0 // pred_region
    _
  $region17: #{tpu_custom_call.1} parent=0 // pred_fallthru
    _
  // Predicated region
  $region18: #{tpu_custom_call.1} parent=0 // pred_check
    _
  $region19: #{tpu_custom_call.1} parent=0 // pred_check_branch
    %19 = sbr.rel (0) target = $region21
  $region20: #{tpu_custom_call.1} parent=0 // pred_region
    _
  $region21: #{tpu_custom_call.1} parent=0 // pred_fallthru
    _
  %p21 = scmp.eq.s32.totalorder 0, 0
  // Predicated region
  $region22: #{tpu_custom_call.1} parent=0 // pred_check
    %p22 = pneg %p21
  $region23: #{tpu_custom_call.1} parent=0 // pred_check_branch
    %24 = sbr.rel (%p22) target = $region25
  $region24: #{tpu_custom_call.1} parent=0 // pred_region
    %v25 = vld [vmem:[%s0] sm:$0xff]
    %v26 = vld [vmem:[%s0 + $0x8] sm:$0xff]
    %v27 = vld [vmem:[%s0 + $0x10] sm:$0xff]
    %v28 = vld [vmem:[%s0 + $0x18] sm:$0xff]
    %v29 = vld [vmem:[%s0 + $0x20] sm:$0xff]
    %v30 = vld [vmem:[%s0 + $0x28] sm:$0xff]
    %v31 = vld [vmem:[%s0 + $0x30] sm:$0xff]
    %v32 = vld [vmem:[%s0 + $0x38] sm:$0xff]
    %v33 = vld [vmem:[%s0 + $0x40] sm:$0xff]
    %v34 = vld [vmem:[%s0 + $0x48] sm:$0xff]
    %v35 = vld [vmem:[%s0 + $0x50] sm:$0xff]
    %v36 = vld [vmem:[%s0 + $0x58] sm:$0xff]
    %v37 = vld [vmem:[%s0 + $0x60] sm:$0xff]
    %v38 = vld [vmem:[%s0 + $0x68] sm:$0xff]
    %v39 = vld [vmem:[%s0 + $0x70] sm:$0xff]
    %v40 = vld [vmem:[%s0 + $0x78] sm:$0xff]
    %vm41 = vcmask 523264
    %v42 = vsel %vm41, %v25, 0.0
    %43 = vadd.xlane.f32.xlu0 %v42
    %v44 = vpop.xlane.xlu0 %43
    %v45 = vsel %vm41, %v26, 0.0
    %46 = vadd.xlane.f32.xlu0 %v45
    %v47 = vpop.xlane.xlu0 %46
    %v48 = vsel %vm41, %v27, 0.0
    %49 = vadd.xlane.f32.xlu0 %v48
    %v50 = vpop.xlane.xlu0 %49
    %v51 = vsel %vm41, %v28, 0.0
    %52 = vadd.xlane.f32.xlu0 %v51
    %v53 = vpop.xlane.xlu0 %52
    %v54 = vsel %vm41, %v29, 0.0
    %55 = vadd.xlane.f32.xlu0 %v54
    %v56 = vpop.xlane.xlu0 %55
    %v57 = vsel %vm41, %v30, 0.0
    %58 = vadd.xlane.f32.xlu0 %v57
    %v59 = vpop.xlane.xlu0 %58
    %v60 = vsel %vm41, %v31, 0.0
    %61 = vadd.xlane.f32.xlu0 %v60
    %v62 = vpop.xlane.xlu0 %61
    %v63 = vsel %vm41, %v32, 0.0
    %64 = vadd.xlane.f32.xlu0 %v63
    %v65 = vpop.xlane.xlu0 %64
    %v66 = vsel %vm41, %v33, 0.0
    %67 = vadd.xlane.f32.xlu0 %v66
    %v68 = vpop.xlane.xlu0 %67
    %v69 = vsel %vm41, %v34, 0.0
    %70 = vadd.xlane.f32.xlu0 %v69
    %v71 = vpop.xlane.xlu0 %70
    %v72 = vsel %vm41, %v35, 0.0
    %73 = vadd.xlane.f32.xlu0 %v72
    %v74 = vpop.xlane.xlu0 %73
    %v75 = vsel %vm41, %v36, 0.0
    %76 = vadd.xlane.f32.xlu0 %v75
    %v77 = vpop.xlane.xlu0 %76
    %v78 = vsel %vm41, %v37, 0.0
    %79 = vadd.xlane.f32.xlu0 %v78
    %v80 = vpop.xlane.xlu0 %79
    %v81 = vsel %vm41, %v38, 0.0
    %82 = vadd.xlane.f32.xlu0 %v81
    %v83 = vpop.xlane.xlu0 %82
    %v84 = vsel %vm41, %v39, 0.0
    %85 = vadd.xlane.f32.xlu0 %v84
    %v86 = vpop.xlane.xlu0 %85
    %v87 = vsel %vm41, %v40, 0.0
    %88 = vadd.xlane.f32.xlu0 %v87
    %v89 = vpop.xlane.xlu0 %88
    %v90 = vrcp.pop 64.0
    %v91 = vmul.f32 %v44, %v90
    %v92 = vmul.f32 %v47, %v90
    %v93 = vmul.f32 %v50, %v90
    %v94 = vmul.f32 %v53, %v90
    %v95 = vmul.f32 %v56, %v90
    %v96 = vmul.f32 %v59, %v90
    %v97 = vmul.f32 %v62, %v90
    %v98 = vmul.f32 %v65, %v90
    %v99 = vmul.f32 %v68, %v90
    %v100 = vmul.f32 %v71, %v90
    %v101 = vmul.f32 %v74, %v90
    %v102 = vmul.f32 %v77, %v90
    %v103 = vmul.f32 %v80, %v90
    %v104 = vmul.f32 %v83, %v90
    %v105 = vmul.f32 %v86, %v90
    %v106 = vmul.f32 %v89, %v90
    %v107 = vsub.f32 %v25, %v91
    %v108 = vsub.f32 %v26, %v92
    %v109 = vsub.f32 %v27, %v93
    %v110 = vsub.f32 %v28, %v94
    %v111 = vsub.f32 %v29, %v95
    %v112 = vsub.f32 %v30, %v96
    %v113 = vsub.f32 %v31, %v97
    %v114 = vsub.f32 %v32, %v98
    %v115 = vsub.f32 %v33, %v99
    %v116 = vsub.f32 %v34, %v100
    %v117 = vsub.f32 %v35, %v101
    %v118 = vsub.f32 %v36, %v102
    %v119 = vsub.f32 %v37, %v103
    %v120 = vsub.f32 %v38, %v104
    %v121 = vsub.f32 %v39, %v105
    %v122 = vsub.f32 %v40, %v106
    %v123 = vmul.f32 %v107, %v107
    %v124 = vmul.f32 %v108, %v108
    %v125 = vmul.f32 %v109, %v109
    %v126 = vmul.f32 %v110, %v110
    %v127 = vmul.f32 %v111, %v111
    %v128 = vmul.f32 %v112, %v112
    %v129 = vmul.f32 %v113, %v113
    %v130 = vmul.f32 %v114, %v114
    %v131 = vmul.f32 %v115, %v115
    %v132 = vmul.f32 %v116, %v116
    %v133 = vmul.f32 %v117, %v117
    %v134 = vmul.f32 %v118, %v118
    %v135 = vmul.f32 %v119, %v119
    %v136 = vmul.f32 %v120, %v120
    %v137 = vmul.f32 %v121, %v121
    %v138 = vmul.f32 %v122, %v122
    %v139 = vsel %vm41, %v123, 0.0
    %140 = vadd.xlane.f32.xlu0 %v139
    %v141 = vpop.xlane.xlu0 %140
    %v142 = vsel %vm41, %v124, 0.0
    %143 = vadd.xlane.f32.xlu0 %v142
    %v144 = vpop.xlane.xlu0 %143
    %v145 = vsel %vm41, %v125, 0.0
    %146 = vadd.xlane.f32.xlu0 %v145
    %v147 = vpop.xlane.xlu0 %146
    %v148 = vsel %vm41, %v126, 0.0
    %149 = vadd.xlane.f32.xlu0 %v148
    %v150 = vpop.xlane.xlu0 %149
    %v151 = vsel %vm41, %v127, 0.0
    %152 = vadd.xlane.f32.xlu0 %v151
    %v153 = vpop.xlane.xlu0 %152
    %v154 = vsel %vm41, %v128, 0.0
    %155 = vadd.xlane.f32.xlu0 %v154
    %v156 = vpop.xlane.xlu0 %155
    %v157 = vsel %vm41, %v129, 0.0
    %158 = vadd.xlane.f32.xlu0 %v157
    %v159 = vpop.xlane.xlu0 %158
    %v160 = vsel %vm41, %v130, 0.0
    %161 = vadd.xlane.f32.xlu0 %v160
    %v162 = vpop.xlane.xlu0 %161
    %v163 = vsel %vm41, %v131, 0.0
    %164 = vadd.xlane.f32.xlu0 %v163
    %v165 = vpop.xlane.xlu0 %164
    %v166 = vsel %vm41, %v132, 0.0
    %167 = vadd.xlane.f32.xlu0 %v166
    %v168 = vpop.xlane.xlu0 %167
    %v169 = vsel %vm41, %v133, 0.0
    %170 = vadd.xlane.f32.xlu0 %v169
    %v171 = vpop.xlane.xlu0 %170
    %v172 = vsel %vm41, %v134, 0.0
    %173 = vadd.xlane.f32.xlu0 %v172
    %v174 = vpop.xlane.xlu0 %173
    %v175 = vsel %vm41, %v135, 0.0
    %176 = vadd.xlane.f32.xlu0 %v175
    %v177 = vpop.xlane.xlu0 %176
    %v178 = vsel %vm41, %v136, 0.0
    %179 = vadd.xlane.f32.xlu0 %v178
    %v180 = vpop.xlane.xlu0 %179
    %v181 = vsel %vm41, %v137, 0.0
    %182 = vadd.xlane.f32.xlu0 %v181
    %v183 = vpop.xlane.xlu0 %182
    %v184 = vsel %vm41, %v138, 0.0
    %185 = vadd.xlane.f32.xlu0 %v184
    %v186 = vpop.xlane.xlu0 %185
    %v187 = vmul.f32 %v141, %v90
    %v188 = vmul.f32 %v144, %v90
    %v189 = vmul.f32 %v147, %v90
    %v190 = vmul.f32 %v150, %v90
    %v191 = vmul.f32 %v153, %v90
    %v192 = vmul.f32 %v156, %v90
    %v193 = vmul.f32 %v159, %v90
    %v194 = vmul.f32 %v162, %v90
    %v195 = vmul.f32 %v165, %v90
    %v196 = vmul.f32 %v168, %v90
    %v197 = vmul.f32 %v171, %v90
    %v198 = vmul.f32 %v174, %v90
    %v199 = vmul.f32 %v177, %v90
    %v200 = vmul.f32 %v180, %v90
    %v201 = vmul.f32 %v183, %v90
    %v202 = vmul.f32 %v186, %v90
    %v203 = vadd.f32 %v187, 1e-06
    %v204 = vadd.f32 %v188, 1e-06
    %v205 = vadd.f32 %v189, 1e-06
    %v206 = vadd.f32 %v190, 1e-06
    %v207 = vadd.f32 %v191, 1e-06
    %v208 = vadd.f32 %v192, 1e-06
    %v209 = vadd.f32 %v193, 1e-06
    %v210 = vadd.f32 %v194, 1e-06
    %v211 = vadd.f32 %v195, 1e-06
    %v212 = vadd.f32 %v196, 1e-06
    %v213 = vadd.f32 %v197, 1e-06
    %v214 = vadd.f32 %v198, 1e-06
    %v215 = vadd.f32 %v199, 1e-06
    %v216 = vadd.f32 %v200, 1e-06
    %v217 = vadd.f32 %v201, 1e-06
    %v218 = vadd.f32 %v202, 1e-06
    %v219 = vrsqrt.pop %v203
    %v220 = vrsqrt.pop %v204
    %v221 = vrsqrt.pop %v205
    %v222 = vrsqrt.pop %v206
    %v223 = vrsqrt.pop %v207
    %v224 = vrsqrt.pop %v208
    %v225 = vrsqrt.pop %v209
    %v226 = vrsqrt.pop %v210
    %v227 = vrsqrt.pop %v211
    %v228 = vrsqrt.pop %v212
    %v229 = vrsqrt.pop %v213
    %v230 = vrsqrt.pop %v214
    %v231 = vrsqrt.pop %v215
    %v232 = vrsqrt.pop %v216
    %v233 = vrsqrt.pop %v217
    %v234 = vrsqrt.pop %v218
    %v235 = vmul.f32 %v107, %v219
    %v236 = vmul.f32 %v108, %v220
    %v237 = vmul.f32 %v109, %v221
    %v238 = vmul.f32 %v110, %v222
    %v239 = vmul.f32 %v111, %v223
    %v240 = vmul.f32 %v112, %v224
    %v241 = vmul.f32 %v113, %v225
    %v242 = vmul.f32 %v114, %v226
    %v243 = vmul.f32 %v115, %v227
    %v244 = vmul.f32 %v116, %v228
    %v245 = vmul.f32 %v117, %v229
    %v246 = vmul.f32 %v118, %v230
    %v247 = vmul.f32 %v119, %v231
    %v248 = vmul.f32 %v120, %v232
    %v249 = vmul.f32 %v121, %v233
    %v250 = vmul.f32 %v122, %v234
    %v251 = vld [vmem:[%s3] sm:$0x1]
    %v253 = vlaneseq
    %v254 = vshrl.u32 %v253, 7
    %v255 = vsub.s32 0, %v254
    %v256 = vrot.slane %v251, %v255
    %v258 = vmul.f32 %v235, %v256
    %v259 = vmul.f32 %v236, %v256
    %v260 = vmul.f32 %v237, %v256
    %v261 = vmul.f32 %v238, %v256
    %v262 = vmul.f32 %v239, %v256
    %v263 = vmul.f32 %v240, %v256
    %v264 = vmul.f32 %v241, %v256
    %v265 = vmul.f32 %v242, %v256
    %v266 = vmul.f32 %v243, %v256
    %v267 = vmul.f32 %v244, %v256
    %v268 = vmul.f32 %v245, %v256
    %v269 = vmul.f32 %v246, %v256
    %v270 = vmul.f32 %v247, %v256
    %v271 = vmul.f32 %v248, %v256
    %v272 = vmul.f32 %v249, %v256
    %v273 = vmul.f32 %v250, %v256
    %v274 = vld [vmem:[%s4] sm:$0x1]
    %v276 = vlaneseq
    %v277 = vshrl.u32 %v276, 7
    %v278 = vsub.s32 0, %v277
    %v279 = vrot.slane %v274, %v278
    %v281 = vadd.f32 %v258, %v279
    %v282 = vadd.f32 %v259, %v279
    %v283 = vadd.f32 %v260, %v279
    %v284 = vadd.f32 %v261, %v279
    %v285 = vadd.f32 %v262, %v279
    %v286 = vadd.f32 %v263, %v279
    %v287 = vadd.f32 %v264, %v279
    %v288 = vadd.f32 %v265, %v279
    %v289 = vadd.f32 %v266, %v279
    %v290 = vadd.f32 %v267, %v279
    %v291 = vadd.f32 %v268, %v279
    %v292 = vadd.f32 %v269, %v279
    %v293 = vadd.f32 %v270, %v279
    %v294 = vadd.f32 %v271, %v279
    %v295 = vadd.f32 %v272, %v279
    %v296 = vadd.f32 %v273, %v279
    %v297 = vpack.c.bf16 %v282, %v281
    %v298 = vpack.c.bf16 %v284, %v283
    %v299 = vpack.c.bf16 %v286, %v285
    %v300 = vpack.c.bf16 %v288, %v287
    %v301 = vpack.c.bf16 %v290, %v289
    %v302 = vpack.c.bf16 %v292, %v291
    %v303 = vpack.c.bf16 %v294, %v293
    %v304 = vpack.c.bf16 %v296, %v295
    %v313 = vunpack.c.l.b16 %v297
    %v314 = vunpack.c.h.b16 %v297
    %v315 = vunpack.c.l.b16 %v298
    %v316 = vunpack.c.h.b16 %v298
    %v317 = vunpack.c.l.b16 %v299
    %v318 = vunpack.c.h.b16 %v299
    %v319 = vunpack.c.l.b16 %v300
    %v320 = vunpack.c.h.b16 %v300
    %v321 = vunpack.c.l.b16 %v301
    %v322 = vunpack.c.h.b16 %v301
    %v323 = vunpack.c.l.b16 %v302
    %v324 = vunpack.c.h.b16 %v302
    %v325 = vunpack.c.l.b16 %v303
    %v326 = vunpack.c.h.b16 %v303
    %v327 = vunpack.c.l.b16 %v304
    %v328 = vunpack.c.h.b16 %v304
    %v329 = vpack.c.b16 %v313, %v313
    %v330 = vpack.c.b16 %v314, %v314
    %v331 = vpack.c.b16 %v315, %v315
    %v332 = vpack.c.b16 %v316, %v316
    %v333 = vpack.c.b16 %v317, %v317
    %v334 = vpack.c.b16 %v318, %v318
    %v335 = vpack.c.b16 %v319, %v319
    %v336 = vpack.c.b16 %v320, %v320
    %v337 = vpack.c.b16 %v321, %v321
    %v338 = vpack.c.b16 %v322, %v322
    %v339 = vpack.c.b16 %v323, %v323
    %v340 = vpack.c.b16 %v324, %v324
    %v341 = vpack.c.b16 %v325, %v325
    %v342 = vpack.c.b16 %v326, %v326
    %v343 = vpack.c.b16 %v327, %v327
    %v344 = vpack.c.b16 %v328, %v328
    %vm361 = vcmask 519168
    %362 = vst.msk [vmem:[#allocation2] sm:$0xf] %vm361, %v329
    %363 = vst.msk [vmem:[#allocation2 + $0x4] sm:$0xf] %vm361, %v330
    %364 = vst.msk [vmem:[#allocation2 + $0x8] sm:$0xf] %vm361, %v331
    %365 = vst.msk [vmem:[#allocation2 + $0xc] sm:$0xf] %vm361, %v332
    %366 = vst.msk [vmem:[#allocation2 + $0x10] sm:$0xf] %vm361, %v333
    %367 = vst.msk [vmem:[#allocation2 + $0x14] sm:$0xf] %vm361, %v334
    %368 = vst.msk [vmem:[#allocation2 + $0x18] sm:$0xf] %vm361, %v335
    %369 = vst.msk [vmem:[#allocation2 + $0x1c] sm:$0xf] %vm361, %v336
    %370 = vst.msk [vmem:[#allocation2 + $0x20] sm:$0xf] %vm361, %v337
    %371 = vst.msk [vmem:[#allocation2 + $0x24] sm:$0xf] %vm361, %v338
    %372 = vst.msk [vmem:[#allocation2 + $0x28] sm:$0xf] %vm361, %v339
    %373 = vst.msk [vmem:[#allocation2 + $0x2c] sm:$0xf] %vm361, %v340
    %374 = vst.msk [vmem:[#allocation2 + $0x30] sm:$0xf] %vm361, %v341
    %375 = vst.msk [vmem:[#allocation2 + $0x34] sm:$0xf] %vm361, %v342
    %376 = vst.msk [vmem:[#allocation2 + $0x38] sm:$0xf] %vm361, %v343
    %377 = vst.msk [vmem:[#allocation2 + $0x3c] sm:$0xf] %vm361, %v344
  $region25: #{tpu_custom_call.1} parent=0 // pred_fallthru
    _
  %v378 = vld [vmem:[#allocation2] sm:$0xf]
  %v379 = vld [vmem:[#allocation2 + $0x4] sm:$0xf]
  %v380 = vld [vmem:[#allocation2 + $0x8] sm:$0xf]
  %v381 = vld [vmem:[#allocation2 + $0xc] sm:$0xf]
  %v382 = vld [vmem:[#allocation2 + $0x10] sm:$0xf]
  %v383 = vld [vmem:[#allocation2 + $0x14] sm:$0xf]
  %v384 = vld [vmem:[#allocation2 + $0x18] sm:$0xf]
  %v385 = vld [vmem:[#allocation2 + $0x1c] sm:$0xf]
  %v386 = vld [vmem:[#allocation2 + $0x20] sm:$0xf]
  %v387 = vld [vmem:[#allocation2 + $0x24] sm:$0xf]
  %v388 = vld [vmem:[#allocation2 + $0x28] sm:$0xf]
  %v389 = vld [vmem:[#allocation2 + $0x2c] sm:$0xf]
  %v390 = vld [vmem:[#allocation2 + $0x30] sm:$0xf]
  %v391 = vld [vmem:[#allocation2 + $0x34] sm:$0xf]
  %v392 = vld [vmem:[#allocation2 + $0x38] sm:$0xf]
  %v393 = vld [vmem:[#allocation2 + $0x3c] sm:$0xf]
  %v394 = vld [vmem:[%s1] sm:$0xff]
  %v395 = vld [vmem:[%s1 + $0x8] sm:$0xff]
  %v396 = vld [vmem:[%s1 + $0x10] sm:$0xff]
  %v397 = vld [vmem:[%s1 + $0x18] sm:$0xff]
  %v398 = vld [vmem:[%s1 + $0x20] sm:$0xff]
  %v399 = vld [vmem:[%s1 + $0x28] sm:$0xff]
  %v400 = vld [vmem:[%s1 + $0x30] sm:$0xff]
  %v401 = vld [vmem:[%s1 + $0x38] sm:$0xff]
  %v402 = vld [vmem:[%s2] sm:$0x3]
  %v404 = vlaneseq
  %v405 = vshrl.u32 %v404, 7
  %v406 = vsub.s32 0, %v405
  %v407 = vrot.slane %v402, %v406
  %v408 = vlaneseq
  %v409 = vshrl.u32 %v408, 7
  %v410 = vsub.s32 1, %v409
  %v411 = vrot.slane %v402, %v410
  %v430 = vunpack.c.l.b16 %v378
  %v431 = vunpack.c.l.b16 %v379
  %v432 = vunpack.c.l.b16 %v380
  %v433 = vunpack.c.l.b16 %v381
  %v434 = vunpack.c.l.b16 %v382
  %v435 = vunpack.c.l.b16 %v383
  %v436 = vunpack.c.l.b16 %v384
  %v437 = vunpack.c.l.b16 %v385
  %v438 = vunpack.c.l.b16 %v386
  %v439 = vunpack.c.l.b16 %v387
  %v440 = vunpack.c.l.b16 %v388
  %v441 = vunpack.c.l.b16 %v389
  %v442 = vunpack.c.l.b16 %v390
  %v443 = vunpack.c.l.b16 %v391
  %v444 = vunpack.c.l.b16 %v392
  %v445 = vunpack.c.l.b16 %v393
  %v446 = vpack.c.b16 %v431, %v430
  %v447 = vpack.c.b16 %v433, %v432
  %v448 = vpack.c.b16 %v435, %v434
  %v449 = vpack.c.b16 %v437, %v436
  %v450 = vpack.c.b16 %v439, %v438
  %v451 = vpack.c.b16 %v441, %v440
  %v452 = vpack.c.b16 %v443, %v442
  %v453 = vpack.c.b16 %v445, %v444
  %v462 = vunpack.c.l.b16 %v394
  %v463 = vunpack.c.h.b16 %v394
  %v464 = vunpack.c.l.b16 %v395
  %v465 = vunpack.c.h.b16 %v395
  %v466 = vunpack.c.l.b16 %v396
  %v467 = vunpack.c.h.b16 %v396
  %v468 = vunpack.c.l.b16 %v397
  %v469 = vunpack.c.h.b16 %v397
  %v470 = vunpack.c.l.b16 %v398
  %v471 = vunpack.c.h.b16 %v398
  %v472 = vunpack.c.l.b16 %v399
  %v473 = vunpack.c.h.b16 %v399
  %v474 = vunpack.c.l.b16 %v400
  %v475 = vunpack.c.h.b16 %v400
  %v476 = vunpack.c.l.b16 %v401
  %v477 = vunpack.c.h.b16 %v401
  %v478 = vpack.c.b16 %v464, %v462
  %v479 = vpack.c.b16 %v465, %v463
  %v480 = vpack.c.b16 %v468, %v466
  %v481 = vpack.c.b16 %v469, %v467
  %v482 = vpack.c.b16 %v472, %v470
  %v483 = vpack.c.b16 %v473, %v471
  %v484 = vpack.c.b16 %v476, %v474
  %v485 = vpack.c.b16 %v477, %v475
  %vm494 = vcmask 523264
  %v496 = vsel %vm494, %v446, 0
  %v499 = vsel %vm494, %v447, 0
  %v502 = vsel %vm494, %v448, 0
  %v505 = vsel %vm494, %v449, 0
  %v508 = vsel %vm494, %v450, 0
  %v511 = vsel %vm494, %v451, 0
  %v514 = vsel %vm494, %v452, 0
  %v517 = vsel %vm494, %v453, 0
  %519 = vmatprep.subr.bf16.mxu0 0
  %520 = vmatpush1.bf16.msra.mxu0 0
  %521 = vmatprep.subr.bf16.mxu0 0
  %522 = vmatpush1.bf16.msra.mxu0 0
  %523 = vmatprep.subr.bf16.mxu0 0
  %524 = vmatpush1.bf16.msra.mxu0 0
  %525 = vmatprep.subr.bf16.mxu0 0
  %526 = vmatpush1.bf16.msra.mxu0 0
  %527 = vmatprep.subr.bf16.mxu0 %v485
  %528 = vmatpush1.bf16.msra.mxu0 %v484
  %529 = vmatprep.subr.bf16.mxu0 %v483
  %530 = vmatpush1.bf16.msra.mxu0 %v482
  %531 = vmatprep.subr.bf16.mxu0 %v481
  %532 = vmatpush1.bf16.msra.mxu0 %v480
  %533 = vmatprep.subr.bf16.mxu0 %v479
  %534 = vmatpush1.bf16.msra.mxu0 %v478
  %535 = vmatprep.subr.bf16.mxu0 0
  %536 = vmatpush2.bf16.msra.mxu0 0
  %537 = vmatprep.subr.bf16.mxu0 0
  %538 = vmatpush2.bf16.msra.mxu0 0
  %539 = vmatprep.subr.bf16.mxu0 0
  %540 = vmatpush2.bf16.msra.mxu0 0
  %541 = vmatprep.subr.bf16.mxu0 0
  %542 = vmatpush2.bf16.msra.mxu0 0
  %543 = vmatprep.subr.bf16.mxu0 0
  %544 = vmatpush2.bf16.msra.mxu0 0
  %545 = vmatprep.subr.bf16.mxu0 0
  %546 = vmatpush2.bf16.msra.mxu0 0
  %547 = vmatprep.subr.bf16.mxu0 0
  %548 = vmatpush2.bf16.msra.mxu0 0
  %549 = vmatprep.subr.bf16.mxu0 0
  %550 = vmatpush2.bf16.msra.mxu0 0
  %551 = vmatprep.mubr.bf16.mxu0 0
  %552 = vmatmul.mubr.bf16.gmra.mxu0 %v496
  %v553 = vpop.f32.mrf.mxu0
  %v554 = vadd.f32 %v407, %v553
  %v555 = vpop.f32.mrf.mxu0
  %v556 = vadd.f32 %v411, %v555
  %v557 = vpop.f32.mrf.mxu0
  %v558 = vadd.f32 %v407, %v557
  %v559 = vpop.f32.mrf.mxu0
  %v560 = vadd.f32 %v411, %v559
  %561 = vmatprep.mubr.bf16.mxu0 0
  %562 = vmatmul.mubr.bf16.gmra.mxu0 %v499
  %v563 = vpop.f32.mrf.mxu0
  %v564 = vadd.f32 %v407, %v563
  %v565 = vpop.f32.mrf.mxu0
  %v566 = vadd.f32 %v411, %v565
  %v567 = vpop.f32.mrf.mxu0
  %v568 = vadd.f32 %v407, %v567
  %v569 = vpop.f32.mrf.mxu0
  %v570 = vadd.f32 %v411, %v569
  %571 = vmatprep.mubr.bf16.mxu0 0
  %572 = vmatmul.mubr.bf16.gmra.mxu0 %v502
  %v573 = vpop.f32.mrf.mxu0
  %v574 = vadd.f32 %v407, %v573
  %v575 = vpop.f32.mrf.mxu0
  %v576 = vadd.f32 %v411, %v575
  %v577 = vpop.f32.mrf.mxu0
  %v578 = vadd.f32 %v407, %v577
  %v579 = vpop.f32.mrf.mxu0
  %v580 = vadd.f32 %v411, %v579
  %581 = vmatprep.mubr.bf16.mxu0 0
  %582 = vmatmul.mubr.bf16.gmra.mxu0 %v505
  %v583 = vpop.f32.mrf.mxu0
  %v584 = vadd.f32 %v407, %v583
  %v585 = vpop.f32.mrf.mxu0
  %v586 = vadd.f32 %v411, %v585
  %v587 = vpop.f32.mrf.mxu0
  %v588 = vadd.f32 %v407, %v587
  %v589 = vpop.f32.mrf.mxu0
  %v590 = vadd.f32 %v411, %v589
  %591 = vmatprep.mubr.bf16.mxu0 0
  %592 = vmatmul.mubr.bf16.gmra.mxu0 %v508
  %v593 = vpop.f32.mrf.mxu0
  %v594 = vadd.f32 %v407, %v593
  %v595 = vpop.f32.mrf.mxu0
  %v596 = vadd.f32 %v411, %v595
  %v597 = vpop.f32.mrf.mxu0
  %v598 = vadd.f32 %v407, %v597
  %v599 = vpop.f32.mrf.mxu0
  %v600 = vadd.f32 %v411, %v599
  %601 = vmatprep.mubr.bf16.mxu0 0
  %602 = vmatmul.mubr.bf16.gmra.mxu0 %v511
  %v603 = vpop.f32.mrf.mxu0
  %v604 = vadd.f32 %v407, %v603
  %v605 = vpop.f32.mrf.mxu0
  %v606 = vadd.f32 %v411, %v605
  %v607 = vpop.f32.mrf.mxu0
  %v608 = vadd.f32 %v407, %v607
  %v609 = vpop.f32.mrf.mxu0
  %v610 = vadd.f32 %v411, %v609
  %611 = vmatprep.mubr.bf16.mxu0 0
  %612 = vmatmul.mubr.bf16.gmra.mxu0 %v514
  %v613 = vpop.f32.mrf.mxu0
  %v614 = vadd.f32 %v407, %v613
  %v615 = vpop.f32.mrf.mxu0
  %v616 = vadd.f32 %v411, %v615
  %v617 = vpop.f32.mrf.mxu0
  %v618 = vadd.f32 %v407, %v617
  %v619 = vpop.f32.mrf.mxu0
  %v620 = vadd.f32 %v411, %v619
  %621 = vmatprep.mubr.bf16.mxu0 0
  %622 = vmatmul.mubr.bf16.gmra.mxu0 %v517
  %v623 = vpop.f32.mrf.mxu0
  %v624 = vadd.f32 %v407, %v623
  %v625 = vpop.f32.mrf.mxu0
  %v626 = vadd.f32 %v411, %v625
  %v627 = vpop.f32.mrf.mxu0
  %v628 = vadd.f32 %v407, %v627
  %v629 = vpop.f32.mrf.mxu0
  %v630 = vadd.f32 %v411, %v629
  %631 = vdwg.mxu0
  %v632 = vpack.c.bf16 %v558, %v554
  %v633 = vpack.c.bf16 %v560, %v556
  %v634 = vpack.c.bf16 %v568, %v564
  %v635 = vpack.c.bf16 %v570, %v566
  %v636 = vpack.c.bf16 %v578, %v574
  %v637 = vpack.c.bf16 %v580, %v576
  %v638 = vpack.c.bf16 %v588, %v584
  %v639 = vpack.c.bf16 %v590, %v586
  %v640 = vpack.c.bf16 %v598, %v594
  %v641 = vpack.c.bf16 %v600, %v596
  %v642 = vpack.c.bf16 %v608, %v604
  %v643 = vpack.c.bf16 %v610, %v606
  %v644 = vpack.c.bf16 %v618, %v614
  %v645 = vpack.c.bf16 %v620, %v616
  %v646 = vpack.c.bf16 %v628, %v624
  %v647 = vpack.c.bf16 %v630, %v626
  %v664 = vunpack.c.l.b16 %v632
  %v665 = vunpack.c.l.b16 %v633
  %v666 = vunpack.c.h.b16 %v632
  %v667 = vunpack.c.h.b16 %v633
  %v668 = vunpack.c.l.b16 %v634
  %v669 = vunpack.c.l.b16 %v635
  %v670 = vunpack.c.h.b16 %v634
  %v671 = vunpack.c.h.b16 %v635
  %v672 = vunpack.c.l.b16 %v636
  %v673 = vunpack.c.l.b16 %v637
  %v674 = vunpack.c.h.b16 %v636
  %v675 = vunpack.c.h.b16 %v637
  %v676 = vunpack.c.l.b16 %v638
  %v677 = vunpack.c.l.b16 %v639
  %v678 = vunpack.c.h.b16 %v638
  %v679 = vunpack.c.h.b16 %v639
  %v680 = vunpack.c.l.b16 %v640
  %v681 = vunpack.c.l.b16 %v641
  %v682 = vunpack.c.h.b16 %v640
  %v683 = vunpack.c.h.b16 %v641
  %v684 = vunpack.c.l.b16 %v642
  %v685 = vunpack.c.l.b16 %v643
  %v686 = vunpack.c.h.b16 %v642
  %v687 = vunpack.c.h.b16 %v643
  %v688 = vunpack.c.l.b16 %v644
  %v689 = vunpack.c.l.b16 %v645
  %v690 = vunpack.c.h.b16 %v644
  %v691 = vunpack.c.h.b16 %v645
  %v692 = vunpack.c.l.b16 %v646
  %v693 = vunpack.c.l.b16 %v647
  %v694 = vunpack.c.h.b16 %v646
  %v695 = vunpack.c.h.b16 %v647
  %v696 = vpack.c.b16 %v665, %v664
  %v697 = vpack.c.b16 %v667, %v666
  %v698 = vpack.c.b16 %v669, %v668
  %v699 = vpack.c.b16 %v671, %v670
  %v700 = vpack.c.b16 %v673, %v672
  %v701 = vpack.c.b16 %v675, %v674
  %v702 = vpack.c.b16 %v677, %v676
  %v703 = vpack.c.b16 %v679, %v678
  %v704 = vpack.c.b16 %v681, %v680
  %v705 = vpack.c.b16 %v683, %v682
  %v706 = vpack.c.b16 %v685, %v684
  %v707 = vpack.c.b16 %v687, %v686
  %v708 = vpack.c.b16 %v689, %v688
  %v709 = vpack.c.b16 %v691, %v690
  %v710 = vpack.c.b16 %v693, %v692
  %v711 = vpack.c.b16 %v695, %v694
  %vm728 = vcmask 1043456
  %vm729 = vcmask 523268
  %vm730 = vmor %vm729, %vm728
  %731 = vst.msk [vmem:[%s5] sm:$0xff] %vm730, %v696
  %732 = vst.msk [vmem:[%s5 + $0x8] sm:$0xff] %vm730, %v697
  %733 = vst.msk [vmem:[%s5 + $0x10] sm:$0xff] %vm730, %v698
  %734 = vst.msk [vmem:[%s5 + $0x18] sm:$0xff] %vm730, %v699
  %735 = vst.msk [vmem:[%s5 + $0x20] sm:$0xff] %vm730, %v700
  %736 = vst.msk [vmem:[%s5 + $0x28] sm:$0xff] %vm730, %v701
  %737 = vst.msk [vmem:[%s5 + $0x30] sm:$0xff] %vm730, %v702
  %738 = vst.msk [vmem:[%s5 + $0x38] sm:$0xff] %vm730, %v703
  %739 = vst.msk [vmem:[%s5 + $0x40] sm:$0xff] %vm730, %v704
  %740 = vst.msk [vmem:[%s5 + $0x48] sm:$0xff] %vm730, %v705
  %741 = vst.msk [vmem:[%s5 + $0x50] sm:$0xff] %vm730, %v706
  %742 = vst.msk [vmem:[%s5 + $0x58] sm:$0xff] %vm730, %v707
  %743 = vst.msk [vmem:[%s5 + $0x60] sm:$0xff] %vm730, %v708
  %744 = vst.msk [vmem:[%s5 + $0x68] sm:$0xff] %vm730, %v709
  %745 = vst.msk [vmem:[%s5 + $0x70] sm:$0xff] %vm730, %v710
  %746 = vst.msk [vmem:[%s5 + $0x78] sm:$0xff] %vm730, %v711
  // Predicated region
  $region26: #{tpu_custom_call.1} parent=0 // pred_check
    _
  $region27: #{tpu_custom_call.1} parent=0 // pred_check_branch
    %748 = sbr.rel (0) target = $region29
  $region28: #{tpu_custom_call.1} parent=0 // pred_region
    _
  $region29: #{tpu_custom_call.1} parent=0 // pred_fallthru
    _
  // Predicated region
  $region30: #{tpu_custom_call.1} parent=0 // pred_check
    _
  $region31: #{tpu_custom_call.1} parent=0 // pred_check_branch
    %750 = sbr.rel (0) target = $region33
  $region32: #{tpu_custom_call.1} parent=0 // pred_region
    _
  $region33: #{tpu_custom_call.1} parent=0 // pred_fallthru
    _

</llo_original>
